<compile_context>
chip_gen: v5e
topology: v5e:2x2
jax: 0.10.0
libtpu: 0.0.40
codegen_flags: <defaults>
</compile_context>

<pallas_src>
import jax
import jax.numpy as jnp
from jax.experimental import pallas as pl
from jax.experimental.pallas import tpu as pltpu

EPS = 1e-5
MM_DTYPE = jnp.bfloat16        # MXU operand dtype (accumulation stays f32)
LANE_TILE = 512                # pixels per lane tile (multiple of 128)


def _make_resblock_kernel(tile_m, m_true, has_conv_id, activation):
    """Build the Resblock kernel specialized for static config."""
    inv_m = 1.0 / float(m_true)

    def kernel(x_ref, w1_ref, w2_ref, wid_ref, gamma_ref, beta_ref, o_ref,
               sums_ref):
        phase = pl.program_id(0)   # 0: bn1/bn_id stats, 1: bn2 stats, 2: output
        j = pl.program_id(1)       # M tile

        # Valid-pixel mask for this tile: padded lanes must not leak into the
        # BN statistics.
        lane = jax.lax.broadcasted_iota(jnp.int32, (1, tile_m), 1)
        valid = (j * tile_m + lane) < m_true

        def mm(w, a):
            # bf16 operands, f32 accumulation on the MXU.
            return jnp.dot(w.astype(MM_DTYPE), a.astype(MM_DTYPE),
                           preferred_element_type=jnp.float32)

        def bn_accum(h, k):
            # Accumulate per-channel sum and sum-of-squares (f32) into scratch.
            hm = jnp.where(valid, h, 0.0)
            sums_ref[2 * k] = sums_ref[2 * k] + jnp.sum(
                hm, axis=-1, keepdims=True)
            sums_ref[2 * k + 1] = sums_ref[2 * k + 1] + jnp.sum(
                hm * hm, axis=-1, keepdims=True)

        def bn_apply(h, k):
            # Recompute mean / rstd from the finalized sums (cheap: (Cout,1)).
            mean = sums_ref[2 * k] * inv_m
            var = jnp.maximum(sums_ref[2 * k + 1] * inv_m - mean * mean, 0.0)
            scale = jax.lax.rsqrt(var + EPS) * gamma_ref[:, k:k + 1]
            return (h - mean) * scale + beta_ref[:, k:k + 1]

        @pl.when((phase == 0) & (j == 0))
        def _():
            sums_ref[...] = jnp.zeros_like(sums_ref)

        # ---- phase 0: stats for bn1 (and the conv-shortcut BN) ------------
        @pl.when(phase == 0)
        def _():
            x = x_ref[...]
            bn_accum(mm(w1_ref[...], x), 0)
            if has_conv_id:
                bn_accum(mm(wid_ref[...], x), 2)

        # ---- phase 1: normalize bn1 -> relu -> conv2; stats for bn2 -------
        @pl.when(phase == 1)
        def _():
            x = x_ref[...]
            a1 = jnp.maximum(bn_apply(mm(w1_ref[...], x), 0), 0.0)
            bn_accum(mm(w2_ref[...], a1), 1)

        # ---- phase 2: full forward, write the output tile ------------------
        @pl.when(phase == 2)
        def _():
            x = x_ref[...]
            a1 = jnp.maximum(bn_apply(mm(w1_ref[...], x), 0), 0.0)
            h2 = bn_apply(mm(w2_ref[...], a1), 1)
            if has_conv_id:
                idn = bn_apply(mm(wid_ref[...], x), 2)
            else:
                idn = x                      # plain identity shortcut (Cin==Cout)
            out = h2 + idn
            if activation:
                out = jnp.maximum(out, 0.0)
            o_ref[...] = out.astype(o_ref.dtype)

    return kernel


def resblock_pallas(x_nchw, params, *, downsample=False, activation=True):
    """Resblock forward.

    x_nchw : (N, Cin, H, W) float32
    params : (w1, w2, wid_or_None, gamma, beta)
             w1  : (Cout, Cin)   1x1 conv weight (PyTorch layout, squeezed)
             w2  : (Cout, Cout)
             wid : (Cout, Cin) or None (None => identity shortcut, Cin==Cout)
             gamma, beta : (Cout, n_bn) with BN index 0=bn1, 1=bn2, 2=shortcut
    """
    w1, w2, wid, gamma, beta = params
    cout, cin = w1.shape
    has_conv_id = wid is not None
    n_bn = 3 if has_conv_id else 2
    assert gamma.shape == (cout, n_bn) and beta.shape == (cout, n_bn)

    stride = 2 if downsample else 1
    x_ds = x_nchw[:, :, ::stride, ::stride]
    n, _, h2, w2_sp = x_ds.shape
    m = n * h2 * w2_sp

    # channels -> sublanes, pixels -> lanes
    x_cm = jnp.moveaxis(x_ds, 1, 0).reshape(cin, m)

    tile_m = min(LANE_TILE, ((m + 127) // 128) * 128)
    m_pad = ((m + tile_m - 1) // tile_m) * tile_m
    if m_pad != m:
        x_cm = jnp.pad(x_cm, ((0, 0), (0, m_pad - m)))
    n_tiles = m_pad // tile_m

    if not has_conv_id:
        assert cin == cout, "identity shortcut requires Cin == Cout"
        wid = jnp.zeros((cout, cin), jnp.float32)   # dummy block, never read

    kernel = _make_resblock_kernel(tile_m, m, has_conv_id, activation)

    grid_spec = pltpu.PrefetchScalarGridSpec(
        num_scalar_prefetch=0,
        grid=(3, n_tiles),                                  # (phase, M tile)
        in_specs=[
            pl.BlockSpec((cin, tile_m), lambda p, j: (0, j)),   # x slab
            pl.BlockSpec((cout, cin), lambda p, j: (0, 0)),     # conv1
            pl.BlockSpec((cout, cout), lambda p, j: (0, 0)),    # conv2
            pl.BlockSpec((cout, cin), lambda p, j: (0, 0)),     # shortcut conv
            pl.BlockSpec((cout, n_bn), lambda p, j: (0, 0)),    # BN gamma
            pl.BlockSpec((cout, n_bn), lambda p, j: (0, 0)),    # BN beta
        ],
        out_specs=pl.BlockSpec((cout, tile_m), lambda p, j: (0, j)),
        scratch_shapes=[pltpu.VMEM((2 * n_bn, cout, 1), jnp.float32)],
    )

    out_cm = pl.pallas_call(
        kernel,
        out_shape=jax.ShapeDtypeStruct((cout, m_pad), jnp.float32),
        grid_spec=grid_spec,
        # Both axes are sequential: the phase axis orders the BN stats /
        # normalize sweeps; the M axis accumulates stats into VMEM scratch.
        compiler_params=pltpu.CompilerParams(
            dimension_semantics=("arbitrary", "arbitrary")),
    )(x_cm, w1, w2, wid, gamma, beta)

    out = out_cm[:, :m].reshape(cout, n, h2, w2_sp)
    return jnp.transpose(out, (1, 0, 2, 3))


def resblock_reference(x_nchw, params, *, downsample=False, activation=True):
    """Pure-JAX reference of the same math (for the correctness check)."""
    w1, w2, wid, gamma, beta = params
    cout, cin = w1.shape
    stride = 2 if downsample else 1
    x_ds = x_nchw[:, :, ::stride, ::stride]
    n, _, h2, w2_sp = x_ds.shape
    x = jnp.moveaxis(x_ds, 1, 0).reshape(cin, -1)

    def mm(w, a):
        return jnp.dot(w.astype(MM_DTYPE), a.astype(MM_DTYPE),
                       preferred_element_type=jnp.float32)

    def bn(h, k):
        mean = jnp.mean(h, axis=1, keepdims=True)
        var = jnp.mean((h - mean) ** 2, axis=1, keepdims=True)
        return ((h - mean) * jax.lax.rsqrt(var + EPS) * gamma[:, k:k + 1]
                + beta[:, k:k + 1])

    a1 = jnp.maximum(bn(mm(w1, x), 0), 0.0)
    h2_ = bn(mm(w2, a1), 1)
    idn = bn(mm(wid, x), 2) if wid is not None else x
    out = h2_ + idn
    if activation:
        out = jnp.maximum(out, 0.0)
    return out.reshape(cout, n, h2, w2_sp).transpose(1, 0, 2, 3)


def init_params(key, cin, cout, has_conv_identity):
    """Deterministic synthetic params (PyTorch-layout 1x1 conv weights)."""
    k1, k2, k3 = jax.random.split(key, 3)
    scale = 0.1
    w1 = scale * jax.random.normal(k1, (cout, cin), jnp.float32)
    w2 = scale * jax.random.normal(k2, (cout, cout), jnp.float32)
    wid = (scale * jax.random.normal(k3, (cout, cin), jnp.float32)
           if has_conv_identity else None)
    n_bn = 3 if has_conv_identity else 2
    gamma = jnp.ones((cout, n_bn), jnp.float32)   # BN weight init
    beta = jnp.zeros((cout, n_bn), jnp.float32)   # BN bias init
    return (w1, w2, wid, gamma, beta)


if __name__ == "__main__":
    key = jax.random.PRNGKey(0)
    kx1, kp1, kx2, kp2 = jax.random.split(key, 4)

    # Config 1: Resblock(4 -> 8, downsample=True): stride-2 + conv/BN shortcut.
    n, cin, h, w, cout = 2, 4, 16, 16, 8
    x1 = jax.random.normal(kx1, (n, cin, h, w), jnp.float32)
    p1 = init_params(kp1, cin, cout, has_conv_identity=True)
    out1 = jax.block_until_ready(
        resblock_pallas(x1, p1, downsample=True, activation=True))
    ref1 = resblock_reference(x1, p1, downsample=True, activation=True)
    assert out1.shape == (n, cout, h // 2, w // 2), out1.shape
    assert jnp.allclose(out1, ref1, atol=1e-3, rtol=1e-3), (
        float(jnp.max(jnp.abs(out1 - ref1))))

    # Config 2: Resblock(8 -> 8): plain identity shortcut; M is not a multiple
    # of the lane tile (exercises multi-tile grid + stats masking).
    n2, c2, h2_, w2_ = 2, 8, 17, 17
    x2 = jax.random.normal(kx2, (n2, c2, h2_, w2_), jnp.float32)
    p2 = init_params(kp2, c2, c2, has_conv_identity=False)
    out2 = jax.block_until_ready(
        resblock_pallas(x2, p2, downsample=False, activation=True))
    ref2 = resblock_reference(x2, p2, downsample=False, activation=True)
    assert out2.shape == (n2, c2, h2_, w2_), out2.shape
    assert jnp.allclose(out2, ref2, atol=1e-3, rtol=1e-3), (
        float(jnp.max(jnp.abs(out2 - ref2))))

    print("KERNEL_OK")
</pallas_src>

<mosaic_0001>
module attributes {stable_mosaic.version = 11 : i64} {
  func.func @kernel(%arg0: i32, %arg1: i32, %arg2: memref<4x128xf32, #tpu.memory_space<vmem>>, %arg3: memref<8x4xf32, #tpu.memory_space<vmem>>, %arg4: memref<8x8xf32, #tpu.memory_space<vmem>>, %arg5: memref<8x4xf32, #tpu.memory_space<vmem>>, %arg6: memref<8x3xf32, #tpu.memory_space<vmem>>, %arg7: memref<8x3xf32, #tpu.memory_space<vmem>>, %arg8: memref<8x128xf32, #tpu.memory_space<vmem>>, %arg9: memref<6x8x1xf32, #tpu.memory_space<vmem>>) attributes {dimension_semantics = [#tpu.dimension_semantics<arbitrary>, #tpu.dimension_semantics<arbitrary>], iteration_bounds = array<i64: 3, 1>, scalar_prefetch = 0 : i64, scratch_operands = 1 : i64, tpu.core_type = #tpu.core_type<tc>, window_params = [{transform_indices = @transform_0, window_bounds = array<i64: 4, 128>}, {pipeline_mode = #tpu.pipeline_mode<synchronous>, transform_indices = @transform_1, window_bounds = array<i64: 8, 4>}, {pipeline_mode = #tpu.pipeline_mode<synchronous>, transform_indices = @transform_2, window_bounds = array<i64: 8, 8>}, {pipeline_mode = #tpu.pipeline_mode<synchronous>, transform_indices = @transform_3, window_bounds = array<i64: 8, 4>}, {pipeline_mode = #tpu.pipeline_mode<synchronous>, transform_indices = @transform_4, window_bounds = array<i64: 8, 3>}, {pipeline_mode = #tpu.pipeline_mode<synchronous>, transform_indices = @transform_5, window_bounds = array<i64: 8, 3>}, {transform_indices = @transform_6, window_bounds = array<i64: 8, 128>}]} {
    %0 = tpu.iota {dimensions = array<i32: 1>} : vector<1x128xi32>
    %c128_i32 = arith.constant 128 : i32
    %1 = arith.muli %arg1, %c128_i32 : i32
    %2 = vector.broadcast %1 : i32 to vector<1x128xi32>
    %3 = arith.addi %2, %0 : vector<1x128xi32>
    %c128_i32_0 = arith.constant 128 : i32
    %4 = vector.broadcast %c128_i32_0 : i32 to vector<1x128xi32>
    %5 = arith.cmpi slt, %3, %4 : vector<1x128xi32>
    %c0_i32 = arith.constant 0 : i32
    %6 = arith.cmpi eq, %arg0, %c0_i32 : i32
    %c0_i32_1 = arith.constant 0 : i32
    %7 = arith.cmpi eq, %arg1, %c0_i32_1 : i32
    %8 = arith.andi %6, %7 : i1
    %9 = arith.extui %8 : i1 to i32
    %c0_i32_2 = arith.constant 0 : i32
    %10 = arith.cmpi ne, %9, %c0_i32_2 : i32
    scf.if %10 {
      %cst = arith.constant 0.000000e+00 : f32
      %20 = vector.broadcast %cst : f32 to vector<6x8x1xf32>
      %c0 = arith.constant 0 : index
      %c0_7 = arith.constant 0 : index
      %c0_8 = arith.constant 0 : index
      %21 = vector.load %arg9[%c0, %c0_7, %c0_8] : memref<6x8x1xf32, #tpu.memory_space<vmem>>, vector<6x8x1xf32>
      tpu.vector_store %arg9[%c0, %c0_7, %c0_8], %20 {strides = array<i32>} : memref<6x8x1xf32, #tpu.memory_space<vmem>>, vector<6x8x1xf32>,
    } else {
    }
    %c0_i32_3 = arith.constant 0 : i32
    %11 = arith.cmpi eq, %arg0, %c0_i32_3 : i32
    %12 = arith.extui %11 : i1 to i32
    %c0_i32_4 = arith.constant 0 : i32
    %13 = arith.cmpi ne, %12, %c0_i32_4 : i32
    scf.if %13 {
      %c0 = arith.constant 0 : index
      %c0_7 = arith.constant 0 : index
      %20 = vector.load %arg2[%c0, %c0_7] : memref<4x128xf32, #tpu.memory_space<vmem>>, vector<4x128xf32>
      %c0_8 = arith.constant 0 : index
      %c0_9 = arith.constant 0 : index
      %21 = vector.load %arg3[%c0_8, %c0_9] : memref<8x4xf32, #tpu.memory_space<vmem>>, vector<8x4xf32>
      %22 = arith.truncf %21 : vector<8x4xf32> to vector<8x4xbf16>
      %23 = arith.truncf %20 : vector<4x128xf32> to vector<4x128xbf16>
      %cst = arith.constant dense<0.000000e+00> : vector<8x128xf32>
      %24 = tpu.matmul %22, %23, %cst {dimension_numbers = #tpu.dot_dimension_numbers<[1], [0], [0], [1], [0, 0, 1, 1], [], []>} : vector<8x4xbf16>, vector<4x128xbf16>, vector<8x128xf32> -> vector<8x128xf32>
      %cst_10 = arith.constant 0.000000e+00 : f32
      %25 = vector.shape_cast %5 : vector<1x128xi1> to vector<1x128xi1>
      %26 = vector.broadcast %25 : vector<1x128xi1> to vector<8x128xi1>
      %27 = vector.broadcast %cst_10 : f32 to vector<8x128xf32>
      %28 = arith.select %26, %24, %27 : vector<8x128xi1>, vector<8x128xf32>
      %c0_11 = arith.constant 0 : index
      %c0_12 = arith.constant 0 : index
      %c0_13 = arith.constant 0 : index
      %29 = vector.load %arg9[%c0_11, %c0_12, %c0_13] : memref<6x8x1xf32, #tpu.memory_space<vmem>>, vector<1x8x1xf32>
      %30 = vector.shape_cast %29 : vector<1x8x1xf32> to vector<8x1xf32>
      %cst_14 = arith.constant dense<0.000000e+00> : vector<8xf32>
      %31 = vector.multi_reduction <add>, %28, %cst_14 [1] : vector<8x128xf32> to vector<8xf32>
      %32 = vector.shape_cast %31 : vector<8xf32> to vector<8x1xf32>
      %33 = arith.addf %30, %32 : vector<8x1xf32>
      %c0_15 = arith.constant 0 : index
      %c0_16 = arith.constant 0 : index
      %c0_17 = arith.constant 0 : index
      %34 = vector.load %arg9[%c0_15, %c0_16, %c0_17] : memref<6x8x1xf32, #tpu.memory_space<vmem>>, vector<1x8x1xf32>
      %35 = vector.shape_cast %34 : vector<1x8x1xf32> to vector<8x1xf32>
      %36 = vector.shape_cast %33 : vector<8x1xf32> to vector<1x8x1xf32>
      tpu.vector_store %arg9[%c0_15, %c0_16, %c0_17], %36 {strides = array<i32>} : memref<6x8x1xf32, #tpu.memory_space<vmem>>, vector<1x8x1xf32>,
      %c1 = arith.constant 1 : index
      %c0_18 = arith.constant 0 : index
      %c0_19 = arith.constant 0 : index
      %37 = vector.load %arg9[%c1, %c0_18, %c0_19] : memref<6x8x1xf32, #tpu.memory_space<vmem>>, vector<1x8x1xf32>
      %38 = vector.shape_cast %37 : vector<1x8x1xf32> to vector<8x1xf32>
      %39 = arith.mulf %28, %28 : vector<8x128xf32>
      %cst_20 = arith.constant dense<0.000000e+00> : vector<8xf32>
      %40 = vector.multi_reduction <add>, %39, %cst_20 [1] : vector<8x128xf32> to vector<8xf32>
      %41 = vector.shape_cast %40 : vector<8xf32> to vector<8x1xf32>
      %42 = arith.addf %38, %41 : vector<8x1xf32>
      %c1_21 = arith.constant 1 : index
      %c0_22 = arith.constant 0 : index
      %c0_23 = arith.constant 0 : index
      %43 = vector.load %arg9[%c1_21, %c0_22, %c0_23] : memref<6x8x1xf32, #tpu.memory_space<vmem>>, vector<1x8x1xf32>
      %44 = vector.shape_cast %43 : vector<1x8x1xf32> to vector<8x1xf32>
      %45 = vector.shape_cast %42 : vector<8x1xf32> to vector<1x8x1xf32>
      tpu.vector_store %arg9[%c1_21, %c0_22, %c0_23], %45 {strides = array<i32>} : memref<6x8x1xf32, #tpu.memory_space<vmem>>, vector<1x8x1xf32>,
      %c0_24 = arith.constant 0 : index
      %c0_25 = arith.constant 0 : index
      %46 = vector.load %arg5[%c0_24, %c0_25] : memref<8x4xf32, #tpu.memory_space<vmem>>, vector<8x4xf32>
      %47 = arith.truncf %46 : vector<8x4xf32> to vector<8x4xbf16>
      %48 = arith.truncf %20 : vector<4x128xf32> to vector<4x128xbf16>
      %cst_26 = arith.constant dense<0.000000e+00> : vector<8x128xf32>
      %49 = tpu.matmul %47, %48, %cst_26 {dimension_numbers = #tpu.dot_dimension_numbers<[1], [0], [0], [1], [0, 0, 1, 1], [], []>} : vector<8x4xbf16>, vector<4x128xbf16>, vector<8x128xf32> -> vector<8x128xf32>
      %cst_27 = arith.constant 0.000000e+00 : f32
      %50 = vector.shape_cast %5 : vector<1x128xi1> to vector<1x128xi1>
      %51 = vector.broadcast %50 : vector<1x128xi1> to vector<8x128xi1>
      %52 = vector.broadcast %cst_27 : f32 to vector<8x128xf32>
      %53 = arith.select %51, %49, %52 : vector<8x128xi1>, vector<8x128xf32>
      %c4 = arith.constant 4 : index
      %c0_28 = arith.constant 0 : index
      %c0_29 = arith.constant 0 : index
      %54 = vector.load %arg9[%c4, %c0_28, %c0_29] : memref<6x8x1xf32, #tpu.memory_space<vmem>>, vector<1x8x1xf32>
      %55 = vector.shape_cast %54 : vector<1x8x1xf32> to vector<8x1xf32>
      %cst_30 = arith.constant dense<0.000000e+00> : vector<8xf32>
      %56 = vector.multi_reduction <add>, %53, %cst_30 [1] : vector<8x128xf32> to vector<8xf32>
      %57 = vector.shape_cast %56 : vector<8xf32> to vector<8x1xf32>
      %58 = arith.addf %55, %57 : vector<8x1xf32>
      %c4_31 = arith.constant 4 : index
      %c0_32 = arith.constant 0 : index
      %c0_33 = arith.constant 0 : index
      %59 = vector.load %arg9[%c4_31, %c0_32, %c0_33] : memref<6x8x1xf32, #tpu.memory_space<vmem>>, vector<1x8x1xf32>
      %60 = vector.shape_cast %59 : vector<1x8x1xf32> to vector<8x1xf32>
      %61 = vector.shape_cast %58 : vector<8x1xf32> to vector<1x8x1xf32>
      tpu.vector_store %arg9[%c4_31, %c0_32, %c0_33], %61 {strides = array<i32>} : memref<6x8x1xf32, #tpu.memory_space<vmem>>, vector<1x8x1xf32>,
      %c5 = arith.constant 5 : index
      %c0_34 = arith.constant 0 : index
      %c0_35 = arith.constant 0 : index
      %62 = vector.load %arg9[%c5, %c0_34, %c0_35] : memref<6x8x1xf32, #tpu.memory_space<vmem>>, vector<1x8x1xf32>
      %63 = vector.shape_cast %62 : vector<1x8x1xf32> to vector<8x1xf32>
      %64 = arith.mulf %53, %53 : vector<8x128xf32>
      %cst_36 = arith.constant dense<0.000000e+00> : vector<8xf32>
      %65 = vector.multi_reduction <add>, %64, %cst_36 [1] : vector<8x128xf32> to vector<8xf32>
      %66 = vector.shape_cast %65 : vector<8xf32> to vector<8x1xf32>
      %67 = arith.addf %63, %66 : vector<8x1xf32>
      %c5_37 = arith.constant 5 : index
      %c0_38 = arith.constant 0 : index
      %c0_39 = arith.constant 0 : index
      %68 = vector.load %arg9[%c5_37, %c0_38, %c0_39] : memref<6x8x1xf32, #tpu.memory_space<vmem>>, vector<1x8x1xf32>
      %69 = vector.shape_cast %68 : vector<1x8x1xf32> to vector<8x1xf32>
      %70 = vector.shape_cast %67 : vector<8x1xf32> to vector<1x8x1xf32>
      tpu.vector_store %arg9[%c5_37, %c0_38, %c0_39], %70 {strides = array<i32>} : memref<6x8x1xf32, #tpu.memory_space<vmem>>, vector<1x8x1xf32>,
    } else {
    }
    %c1_i32 = arith.constant 1 : i32
    %14 = arith.cmpi eq, %arg0, %c1_i32 : i32
    %15 = arith.extui %14 : i1 to i32
    %c0_i32_5 = arith.constant 0 : i32
    %16 = arith.cmpi ne, %15, %c0_i32_5 : i32
    scf.if %16 {
      %c0 = arith.constant 0 : index
      %c0_7 = arith.constant 0 : index
      %20 = vector.load %arg2[%c0, %c0_7] : memref<4x128xf32, #tpu.memory_space<vmem>>, vector<4x128xf32>
      %c0_8 = arith.constant 0 : index
      %c0_9 = arith.constant 0 : index
      %21 = vector.load %arg3[%c0_8, %c0_9] : memref<8x4xf32, #tpu.memory_space<vmem>>, vector<8x4xf32>
      %22 = arith.truncf %21 : vector<8x4xf32> to vector<8x4xbf16>
      %23 = arith.truncf %20 : vector<4x128xf32> to vector<4x128xbf16>
      %cst = arith.constant dense<0.000000e+00> : vector<8x128xf32>
      %24 = tpu.matmul %22, %23, %cst {dimension_numbers = #tpu.dot_dimension_numbers<[1], [0], [0], [1], [0, 0, 1, 1], [], []>} : vector<8x4xbf16>, vector<4x128xbf16>, vector<8x128xf32> -> vector<8x128xf32>
      %c0_10 = arith.constant 0 : index
      %c0_11 = arith.constant 0 : index
      %c0_12 = arith.constant 0 : index
      %25 = vector.load %arg9[%c0_10, %c0_11, %c0_12] : memref<6x8x1xf32, #tpu.memory_space<vmem>>, vector<1x8x1xf32>
      %26 = vector.shape_cast %25 : vector<1x8x1xf32> to vector<8x1xf32>
      %cst_13 = arith.constant 7.812500e-03 : f32
      %27 = vector.broadcast %cst_13 : f32 to vector<8x1xf32>
      %28 = arith.mulf %26, %27 : vector<8x1xf32>
      %c1 = arith.constant 1 : index
      %c0_14 = arith.constant 0 : index
      %c0_15 = arith.constant 0 : index
      %29 = vector.load %arg9[%c1, %c0_14, %c0_15] : memref<6x8x1xf32, #tpu.memory_space<vmem>>, vector<1x8x1xf32>
      %30 = vector.shape_cast %29 : vector<1x8x1xf32> to vector<8x1xf32>
      %cst_16 = arith.constant 7.812500e-03 : f32
      %31 = vector.broadcast %cst_16 : f32 to vector<8x1xf32>
      %32 = arith.mulf %30, %31 : vector<8x1xf32>
      %33 = arith.mulf %28, %28 : vector<8x1xf32>
      %34 = arith.subf %32, %33 : vector<8x1xf32>
      %cst_17 = arith.constant 0.000000e+00 : f32
      %35 = vector.broadcast %cst_17 : f32 to vector<8x1xf32>
      %36 = arith.maximumf %34, %35 : vector<8x1xf32>
      %cst_18 = arith.constant 9.99999974E-6 : f32
      %37 = vector.broadcast %cst_18 : f32 to vector<8x1xf32>
      %38 = arith.addf %36, %37 : vector<8x1xf32>
      %39 = math.rsqrt %38 : vector<8x1xf32>
      %c0_19 = arith.constant 0 : index
      %c0_20 = arith.constant 0 : index
      %40 = vector.load %arg6[%c0_19, %c0_20] : memref<8x3xf32, #tpu.memory_space<vmem>>, vector<8x1xf32>
      %41 = arith.mulf %39, %40 : vector<8x1xf32>
      %42 = vector.broadcast %28 : vector<8x1xf32> to vector<8x128xf32>
      %43 = arith.subf %24, %42 : vector<8x128xf32>
      %44 = vector.broadcast %41 : vector<8x1xf32> to vector<8x128xf32>
      %45 = arith.mulf %43, %44 : vector<8x128xf32>
      %c0_21 = arith.constant 0 : index
      %c0_22 = arith.constant 0 : index
      %46 = vector.load %arg7[%c0_21, %c0_22] : memref<8x3xf32, #tpu.memory_space<vmem>>, vector<8x1xf32>
      %47 = vector.broadcast %46 : vector<8x1xf32> to vector<8x128xf32>
      %48 = arith.addf %45, %47 : vector<8x128xf32>
      %cst_23 = arith.constant 0.000000e+00 : f32
      %49 = vector.broadcast %cst_23 : f32 to vector<8x128xf32>
      %50 = arith.maximumf %48, %49 : vector<8x128xf32>
      %c0_24 = arith.constant 0 : index
      %c0_25 = arith.constant 0 : index
      %51 = vector.load %arg4[%c0_24, %c0_25] : memref<8x8xf32, #tpu.memory_space<vmem>>, vector<8x8xf32>
      %52 = arith.truncf %51 : vector<8x8xf32> to vector<8x8xbf16>
      %53 = arith.truncf %50 : vector<8x128xf32> to vector<8x128xbf16>
      %cst_26 = arith.constant dense<0.000000e+00> : vector<8x128xf32>
      %54 = tpu.matmul %52, %53, %cst_26 {dimension_numbers = #tpu.dot_dimension_numbers<[1], [0], [0], [1], [0, 0, 1, 1], [], []>} : vector<8x8xbf16>, vector<8x128xbf16>, vector<8x128xf32> -> vector<8x128xf32>
      %cst_27 = arith.constant 0.000000e+00 : f32
      %55 = vector.shape_cast %5 : vector<1x128xi1> to vector<1x128xi1>
      %56 = vector.broadcast %55 : vector<1x128xi1> to vector<8x128xi1>
      %57 = vector.broadcast %cst_27 : f32 to vector<8x128xf32>
      %58 = arith.select %56, %54, %57 : vector<8x128xi1>, vector<8x128xf32>
      %c2 = arith.constant 2 : index
      %c0_28 = arith.constant 0 : index
      %c0_29 = arith.constant 0 : index
      %59 = vector.load %arg9[%c2, %c0_28, %c0_29] : memref<6x8x1xf32, #tpu.memory_space<vmem>>, vector<1x8x1xf32>
      %60 = vector.shape_cast %59 : vector<1x8x1xf32> to vector<8x1xf32>
      %cst_30 = arith.constant dense<0.000000e+00> : vector<8xf32>
      %61 = vector.multi_reduction <add>, %58, %cst_30 [1] : vector<8x128xf32> to vector<8xf32>
      %62 = vector.shape_cast %61 : vector<8xf32> to vector<8x1xf32>
      %63 = arith.addf %60, %62 : vector<8x1xf32>
      %c2_31 = arith.constant 2 : index
      %c0_32 = arith.constant 0 : index
      %c0_33 = arith.constant 0 : index
      %64 = vector.load %arg9[%c2_31, %c0_32, %c0_33] : memref<6x8x1xf32, #tpu.memory_space<vmem>>, vector<1x8x1xf32>
      %65 = vector.shape_cast %64 : vector<1x8x1xf32> to vector<8x1xf32>
      %66 = vector.shape_cast %63 : vector<8x1xf32> to vector<1x8x1xf32>
      tpu.vector_store %arg9[%c2_31, %c0_32, %c0_33], %66 {strides = array<i32>} : memref<6x8x1xf32, #tpu.memory_space<vmem>>, vector<1x8x1xf32>,
      %c3 = arith.constant 3 : index
      %c0_34 = arith.constant 0 : index
      %c0_35 = arith.constant 0 : index
      %67 = vector.load %arg9[%c3, %c0_34, %c0_35] : memref<6x8x1xf32, #tpu.memory_space<vmem>>, vector<1x8x1xf32>
      %68 = vector.shape_cast %67 : vector<1x8x1xf32> to vector<8x1xf32>
      %69 = arith.mulf %58, %58 : vector<8x128xf32>
      %cst_36 = arith.constant dense<0.000000e+00> : vector<8xf32>
      %70 = vector.multi_reduction <add>, %69, %cst_36 [1] : vector<8x128xf32> to vector<8xf32>
      %71 = vector.shape_cast %70 : vector<8xf32> to vector<8x1xf32>
      %72 = arith.addf %68, %71 : vector<8x1xf32>
      %c3_37 = arith.constant 3 : index
      %c0_38 = arith.constant 0 : index
      %c0_39 = arith.constant 0 : index
      %73 = vector.load %arg9[%c3_37, %c0_38, %c0_39] : memref<6x8x1xf32, #tpu.memory_space<vmem>>, vector<1x8x1xf32>
      %74 = vector.shape_cast %73 : vector<1x8x1xf32> to vector<8x1xf32>
      %75 = vector.shape_cast %72 : vector<8x1xf32> to vector<1x8x1xf32>
      tpu.vector_store %arg9[%c3_37, %c0_38, %c0_39], %75 {strides = array<i32>} : memref<6x8x1xf32, #tpu.memory_space<vmem>>, vector<1x8x1xf32>,
    } else {
    }
    %c2_i32 = arith.constant 2 : i32
    %17 = arith.cmpi eq, %arg0, %c2_i32 : i32
    %18 = arith.extui %17 : i1 to i32
    %c0_i32_6 = arith.constant 0 : i32
    %19 = arith.cmpi ne, %18, %c0_i32_6 : i32
    scf.if %19 {
      %c0 = arith.constant 0 : index
      %c0_7 = arith.constant 0 : index
      %20 = vector.load %arg2[%c0, %c0_7] : memref<4x128xf32, #tpu.memory_space<vmem>>, vector<4x128xf32>
      %c0_8 = arith.constant 0 : index
      %c0_9 = arith.constant 0 : index
      %21 = vector.load %arg3[%c0_8, %c0_9] : memref<8x4xf32, #tpu.memory_space<vmem>>, vector<8x4xf32>
      %22 = arith.truncf %21 : vector<8x4xf32> to vector<8x4xbf16>
      %23 = arith.truncf %20 : vector<4x128xf32> to vector<4x128xbf16>
      %cst = arith.constant dense<0.000000e+00> : vector<8x128xf32>
      %24 = tpu.matmul %22, %23, %cst {dimension_numbers = #tpu.dot_dimension_numbers<[1], [0], [0], [1], [0, 0, 1, 1], [], []>} : vector<8x4xbf16>, vector<4x128xbf16>, vector<8x128xf32> -> vector<8x128xf32>
      %c0_10 = arith.constant 0 : index
      %c0_11 = arith.constant 0 : index
      %c0_12 = arith.constant 0 : index
      %25 = vector.load %arg9[%c0_10, %c0_11, %c0_12] : memref<6x8x1xf32, #tpu.memory_space<vmem>>, vector<1x8x1xf32>
      %26 = vector.shape_cast %25 : vector<1x8x1xf32> to vector<8x1xf32>
      %cst_13 = arith.constant 7.812500e-03 : f32
      %27 = vector.broadcast %cst_13 : f32 to vector<8x1xf32>
      %28 = arith.mulf %26, %27 : vector<8x1xf32>
      %c1 = arith.constant 1 : index
      %c0_14 = arith.constant 0 : index
      %c0_15 = arith.constant 0 : index
      %29 = vector.load %arg9[%c1, %c0_14, %c0_15] : memref<6x8x1xf32, #tpu.memory_space<vmem>>, vector<1x8x1xf32>
      %30 = vector.shape_cast %29 : vector<1x8x1xf32> to vector<8x1xf32>
      %cst_16 = arith.constant 7.812500e-03 : f32
      %31 = vector.broadcast %cst_16 : f32 to vector<8x1xf32>
      %32 = arith.mulf %30, %31 : vector<8x1xf32>
      %33 = arith.mulf %28, %28 : vector<8x1xf32>
      %34 = arith.subf %32, %33 : vector<8x1xf32>
      %cst_17 = arith.constant 0.000000e+00 : f32
      %35 = vector.broadcast %cst_17 : f32 to vector<8x1xf32>
      %36 = arith.maximumf %34, %35 : vector<8x1xf32>
      %cst_18 = arith.constant 9.99999974E-6 : f32
      %37 = vector.broadcast %cst_18 : f32 to vector<8x1xf32>
      %38 = arith.addf %36, %37 : vector<8x1xf32>
      %39 = math.rsqrt %38 : vector<8x1xf32>
      %c0_19 = arith.constant 0 : index
      %c0_20 = arith.constant 0 : index
      %40 = vector.load %arg6[%c0_19, %c0_20] : memref<8x3xf32, #tpu.memory_space<vmem>>, vector<8x1xf32>
      %41 = arith.mulf %39, %40 : vector<8x1xf32>
      %42 = vector.broadcast %28 : vector<8x1xf32> to vector<8x128xf32>
      %43 = arith.subf %24, %42 : vector<8x128xf32>
      %44 = vector.broadcast %41 : vector<8x1xf32> to vector<8x128xf32>
      %45 = arith.mulf %43, %44 : vector<8x128xf32>
      %c0_21 = arith.constant 0 : index
      %c0_22 = arith.constant 0 : index
      %46 = vector.load %arg7[%c0_21, %c0_22] : memref<8x3xf32, #tpu.memory_space<vmem>>, vector<8x1xf32>
      %47 = vector.broadcast %46 : vector<8x1xf32> to vector<8x128xf32>
      %48 = arith.addf %45, %47 : vector<8x128xf32>
      %cst_23 = arith.constant 0.000000e+00 : f32
      %49 = vector.broadcast %cst_23 : f32 to vector<8x128xf32>
      %50 = arith.maximumf %48, %49 : vector<8x128xf32>
      %c0_24 = arith.constant 0 : index
      %c0_25 = arith.constant 0 : index
      %51 = vector.load %arg4[%c0_24, %c0_25] : memref<8x8xf32, #tpu.memory_space<vmem>>, vector<8x8xf32>
      %52 = arith.truncf %51 : vector<8x8xf32> to vector<8x8xbf16>
      %53 = arith.truncf %50 : vector<8x128xf32> to vector<8x128xbf16>
      %cst_26 = arith.constant dense<0.000000e+00> : vector<8x128xf32>
      %54 = tpu.matmul %52, %53, %cst_26 {dimension_numbers = #tpu.dot_dimension_numbers<[1], [0], [0], [1], [0, 0, 1, 1], [], []>} : vector<8x8xbf16>, vector<8x128xbf16>, vector<8x128xf32> -> vector<8x128xf32>
      %c2 = arith.constant 2 : index
      %c0_27 = arith.constant 0 : index
      %c0_28 = arith.constant 0 : index
      %55 = vector.load %arg9[%c2, %c0_27, %c0_28] : memref<6x8x1xf32, #tpu.memory_space<vmem>>, vector<1x8x1xf32>
      %56 = vector.shape_cast %55 : vector<1x8x1xf32> to vector<8x1xf32>
      %cst_29 = arith.constant 7.812500e-03 : f32
      %57 = vector.broadcast %cst_29 : f32 to vector<8x1xf32>
      %58 = arith.mulf %56, %57 : vector<8x1xf32>
      %c3 = arith.constant 3 : index
      %c0_30 = arith.constant 0 : index
      %c0_31 = arith.constant 0 : index
      %59 = vector.load %arg9[%c3, %c0_30, %c0_31] : memref<6x8x1xf32, #tpu.memory_space<vmem>>, vector<1x8x1xf32>
      %60 = vector.shape_cast %59 : vector<1x8x1xf32> to vector<8x1xf32>
      %cst_32 = arith.constant 7.812500e-03 : f32
      %61 = vector.broadcast %cst_32 : f32 to vector<8x1xf32>
      %62 = arith.mulf %60, %61 : vector<8x1xf32>
      %63 = arith.mulf %58, %58 : vector<8x1xf32>
      %64 = arith.subf %62, %63 : vector<8x1xf32>
      %cst_33 = arith.constant 0.000000e+00 : f32
      %65 = vector.broadcast %cst_33 : f32 to vector<8x1xf32>
      %66 = arith.maximumf %64, %65 : vector<8x1xf32>
      %cst_34 = arith.constant 9.99999974E-6 : f32
      %67 = vector.broadcast %cst_34 : f32 to vector<8x1xf32>
      %68 = arith.addf %66, %67 : vector<8x1xf32>
      %69 = math.rsqrt %68 : vector<8x1xf32>
      %c0_35 = arith.constant 0 : index
      %c1_36 = arith.constant 1 : index
      %70 = vector.load %arg6[%c0_35, %c1_36] : memref<8x3xf32, #tpu.memory_space<vmem>>, vector<8x1xf32>
      %71 = arith.mulf %69, %70 : vector<8x1xf32>
      %72 = vector.broadcast %58 : vector<8x1xf32> to vector<8x128xf32>
      %73 = arith.subf %54, %72 : vector<8x128xf32>
      %74 = vector.broadcast %71 : vector<8x1xf32> to vector<8x128xf32>
      %75 = arith.mulf %73, %74 : vector<8x128xf32>
      %c0_37 = arith.constant 0 : index
      %c1_38 = arith.constant 1 : index
      %76 = vector.load %arg7[%c0_37, %c1_38] : memref<8x3xf32, #tpu.memory_space<vmem>>, vector<8x1xf32>
      %77 = vector.broadcast %76 : vector<8x1xf32> to vector<8x128xf32>
      %78 = arith.addf %75, %77 : vector<8x128xf32>
      %c0_39 = arith.constant 0 : index
      %c0_40 = arith.constant 0 : index
      %79 = vector.load %arg5[%c0_39, %c0_40] : memref<8x4xf32, #tpu.memory_space<vmem>>, vector<8x4xf32>
      %80 = arith.truncf %79 : vector<8x4xf32> to vector<8x4xbf16>
      %81 = arith.truncf %20 : vector<4x128xf32> to vector<4x128xbf16>
      %cst_41 = arith.constant dense<0.000000e+00> : vector<8x128xf32>
      %82 = tpu.matmul %80, %81, %cst_41 {dimension_numbers = #tpu.dot_dimension_numbers<[1], [0], [0], [1], [0, 0, 1, 1], [], []>} : vector<8x4xbf16>, vector<4x128xbf16>, vector<8x128xf32> -> vector<8x128xf32>
      %c4 = arith.constant 4 : index
      %c0_42 = arith.constant 0 : index
      %c0_43 = arith.constant 0 : index
      %83 = vector.load %arg9[%c4, %c0_42, %c0_43] : memref<6x8x1xf32, #tpu.memory_space<vmem>>, vector<1x8x1xf32>
      %84 = vector.shape_cast %83 : vector<1x8x1xf32> to vector<8x1xf32>
      %cst_44 = arith.constant 7.812500e-03 : f32
      %85 = vector.broadcast %cst_44 : f32 to vector<8x1xf32>
      %86 = arith.mulf %84, %85 : vector<8x1xf32>
      %c5 = arith.constant 5 : index
      %c0_45 = arith.constant 0 : index
      %c0_46 = arith.constant 0 : index
      %87 = vector.load %arg9[%c5, %c0_45, %c0_46] : memref<6x8x1xf32, #tpu.memory_space<vmem>>, vector<1x8x1xf32>
      %88 = vector.shape_cast %87 : vector<1x8x1xf32> to vector<8x1xf32>
      %cst_47 = arith.constant 7.812500e-03 : f32
      %89 = vector.broadcast %cst_47 : f32 to vector<8x1xf32>
      %90 = arith.mulf %88, %89 : vector<8x1xf32>
      %91 = arith.mulf %86, %86 : vector<8x1xf32>
      %92 = arith.subf %90, %91 : vector<8x1xf32>
      %cst_48 = arith.constant 0.000000e+00 : f32
      %93 = vector.broadcast %cst_48 : f32 to vector<8x1xf32>
      %94 = arith.maximumf %92, %93 : vector<8x1xf32>
      %cst_49 = arith.constant 9.99999974E-6 : f32
      %95 = vector.broadcast %cst_49 : f32 to vector<8x1xf32>
      %96 = arith.addf %94, %95 : vector<8x1xf32>
      %97 = math.rsqrt %96 : vector<8x1xf32>
      %c0_50 = arith.constant 0 : index
      %c2_51 = arith.constant 2 : index
      %98 = vector.load %arg6[%c0_50, %c2_51] : memref<8x3xf32, #tpu.memory_space<vmem>>, vector<8x1xf32>
      %99 = arith.mulf %97, %98 : vector<8x1xf32>
      %100 = vector.broadcast %86 : vector<8x1xf32> to vector<8x128xf32>
      %101 = arith.subf %82, %100 : vector<8x128xf32>
      %102 = vector.broadcast %99 : vector<8x1xf32> to vector<8x128xf32>
      %103 = arith.mulf %101, %102 : vector<8x128xf32>
      %c0_52 = arith.constant 0 : index
      %c2_53 = arith.constant 2 : index
      %104 = vector.load %arg7[%c0_52, %c2_53] : memref<8x3xf32, #tpu.memory_space<vmem>>, vector<8x1xf32>
      %105 = vector.broadcast %104 : vector<8x1xf32> to vector<8x128xf32>
      %106 = arith.addf %103, %105 : vector<8x128xf32>
      %107 = arith.addf %78, %106 : vector<8x128xf32>
      %cst_54 = arith.constant 0.000000e+00 : f32
      %108 = vector.broadcast %cst_54 : f32 to vector<8x128xf32>
      %109 = arith.maximumf %107, %108 : vector<8x128xf32>
      %c0_55 = arith.constant 0 : index
      %c0_56 = arith.constant 0 : index
      %110 = vector.load %arg8[%c0_55, %c0_56] : memref<8x128xf32, #tpu.memory_space<vmem>>, vector<8x128xf32>
      tpu.vector_store %arg8[%c0_55, %c0_56], %109 {strides = array<i32>} : memref<8x128xf32, #tpu.memory_space<vmem>>, vector<8x128xf32>,
    } else {
    }
    return
  }
  func.func @transform_0(%arg0: i32, %arg1: i32) -> (i32, i32) {
    %c0_i32 = arith.constant 0 : i32
    %c0_i32_0 = arith.constant 0 : i32
    return %c0_i32, %arg1 : i32, i32
  }
  func.func @transform_1(%arg0: i32, %arg1: i32) -> (i32, i32) {
    %c0_i32 = arith.constant 0 : i32
    %c0_i32_0 = arith.constant 0 : i32
    %c0_i32_1 = arith.constant 0 : i32
    return %c0_i32, %c0_i32_0 : i32, i32
  }
  func.func @transform_2(%arg0: i32, %arg1: i32) -> (i32, i32) {
    %c0_i32 = arith.constant 0 : i32
    %c0_i32_0 = arith.constant 0 : i32
    %c0_i32_1 = arith.constant 0 : i32
    return %c0_i32, %c0_i32_0 : i32, i32
  }
  func.func @transform_3(%arg0: i32, %arg1: i32) -> (i32, i32) {
    %c0_i32 = arith.constant 0 : i32
    %c0_i32_0 = arith.constant 0 : i32
    %c0_i32_1 = arith.constant 0 : i32
    return %c0_i32, %c0_i32_0 : i32, i32
  }
  func.func @transform_4(%arg0: i32, %arg1: i32) -> (i32, i32) {
    %c0_i32 = arith.constant 0 : i32
    %c0_i32_0 = arith.constant 0 : i32
    %c0_i32_1 = arith.constant 0 : i32
    return %c0_i32, %c0_i32_0 : i32, i32
  }
  func.func @transform_5(%arg0: i32, %arg1: i32) -> (i32, i32) {
    %c0_i32 = arith.constant 0 : i32
    %c0_i32_0 = arith.constant 0 : i32
    %c0_i32_1 = arith.constant 0 : i32
    return %c0_i32, %c0_i32_0 : i32, i32
  }
  func.func @transform_6(%arg0: i32, %arg1: i32) -> (i32, i32) {
    %c0_i32 = arith.constant 0 : i32
    %c0_i32_0 = arith.constant 0 : i32
    return %c0_i32, %arg1 : i32, i32
  }
}

</mosaic_0001>

<llo_original>
// kernel: tpu_custom_call.1
$region0: #{tpu_custom_call.1}
  #allocation0 [shape = 'u32[]', space=smem, size = 0x4, offset = 0x4, fixed_abs, tag = 'smem constant byte address 0x4 - core index']
  #allocation1 [shape = 'u32[72,128]{1,0:T(1,128)}', space=vmem, size = 0x9000, scoped, tag = 'internal scratch']
  #allocation2 [shape = 'f32[6,8,1]{2,1,0:T(8,128)}', space=vmem, size = 0x6000, scoped, tag = 'scratch operand']
  %s0 = inlined_call_operand.vmem [shape: f32[4,128], index: 0, kind: input, shape index: {}]
  %s1 = inlined_call_operand.vmem [shape: f32[8,4], index: 1, kind: input, shape index: {}]
  %s2 = inlined_call_operand.vmem [shape: f32[8,8], index: 2, kind: input, shape index: {}]
  %s3 = inlined_call_operand.vmem [shape: f32[8,4], index: 3, kind: input, shape index: {}]
  %s4 = inlined_call_operand.vmem [shape: f32[8,3], index: 4, kind: input, shape index: {}]
  %s5 = inlined_call_operand.vmem [shape: f32[8,3], index: 5, kind: input, shape index: {}]
  %s6 = inlined_call_operand.hbm [shape: f32[8,128], index: 6, kind: output, shape index: {}]
  %s7 = sld [smem:[#allocation0]]
  $region73: #{tpu_custom_call.1} parent=0
    _
  %s9 = ssub.s32 1, %s7
  %s10 = scalar_select 0, %s9, %s7
  $region1: #{tpu_custom_call.1} parent=0
    #allocation3 [shape = 'u8[4096]{0}', space=vmem, size = 0x1000, scoped, tag = 'output window, operand 0, single buffered']
    #allocation4 [shape = 's32[2]{0}', space=sflag, size = 0x8, scoped, tag = 'scoped memory for tpu_custom_call.1']
    %11 = vsyncpa [#allocation4], 0
    loop: start=0, step=1, limit=5
    $region2: #{tpu_custom_call.1} parent=1 // loop_pre_header
      _
    $region3: #{tpu_custom_call.1} parent=1 // loop_header
      %s13 = sphi 0, %s17
      %p14 = scmp.ge.s32.totalorder %s13, 5
      %s20 = sphi 0, %s32
      %s21 = sphi 0, %s28
      %s22 = sphi 0, %s20
      %s23 = sphi 0, %s21
      %s24 = sphi 0, %s22
      %s25 = sphi 0, %s23
      %s35 = sphi 0, %s37
      %s38 = sphi 0, %s35
      %s39 = sphi 0, %s38
      %s55 = sphi 0, %s39
      %s59 = sphi 0, %s59
      %s61 = sphi 0, %s59
      %s62 = sphi 0, %s61
      %s76 = sphi 0, %s62
      %s80 = sphi 0, %s80
      %s82 = sphi 0, %s80
      %s83 = sphi 0, %s82
      %s97 = sphi 0, %s83
      %s101 = sphi 0, %s101
      %s103 = sphi 0, %s101
      %s104 = sphi 0, %s103
      %s118 = sphi 0, %s104
      %s122 = sphi 0, %s122
      %s124 = sphi 0, %s122
      %s125 = sphi 0, %s124
      %s139 = sphi 0, %s125
      %s143 = sphi 0, %s143
      %s145 = sphi 0, %s143
      %s146 = sphi 0, %s145
      %s160 = sphi 0, %s146
      %s166 = sphi 0, %s168
      %s169 = sphi 0, %s166
      %s170 = sphi 0, %s169
      %s186 = sphi 0, %s170
    $region4: #{tpu_custom_call.1} parent=1 // loop_header_branch
      %16 = sbr.rel (%p14) target = $region8
    $region5: #{tpu_custom_call.1} parent=1 // loop_body
      %s18 = ssub.s32 %s13, 1
      %s19 = ssub.s32 %s13, 2
      %s26 = sadd.s32 1, %s21
      %p27 = scmp.ge.s32.totalorder %s26, 1
      %s28 = scalar_select %p27, 0, %s26
      %s29 = sadd.s32 1, %s20
      %s30 = scalar_select %p27, %s29, %s20
      %p31 = scmp.ge.s32.totalorder %s30, 3
      %s32 = scalar_select %p31, 0, %s30
      %s33 = ssub.s32 %s21, %s28
      %p34 = scmp.eq.s32.totalorder %s33, 0
      %s36 = sadd.s32 %s35, 1
      %s37 = scalar_select %p34, %s35, %s36
      %p40 = pneg %p34
      %p41 = scmp.eq.s32.totalorder %s13, 2
      %p42 = por %p40, %p41
      %p43 = scmp.ne.s32.totalorder %s35, %s38
      %p44 = scmp.eq.s32.totalorder %s13, 0
      %p45 = por %p43, %p44
      %p46 = scmp.ne.s32.totalorder %s35, %s38
      %p47 = scmp.eq.s32.totalorder %s18, 2
      %p48 = por %p46, %p47
      %p49 = scmp.ne.s32.totalorder %s38, %s39
      %p50 = scmp.eq.s32.totalorder %s18, 0
      %p51 = por %p49, %p50
      %p52 = scmp.ne.s32.totalorder %s38, %s39
      %p53 = scmp.eq.s32.totalorder %s19, 2
      %p54 = por %p52, %p53
      %p56 = scmp.ne.s32.totalorder %s39, %s55
      %p57 = scmp.eq.s32.totalorder %s19, 0
      %p58 = por %p56, %p57
      %s60 = sadd.s32 %s59, 1
      %p63 = scmp.eq.s32.totalorder %s13, 2
      %p64 = scmp.ne.s32.totalorder %s59, %s61
      %p65 = scmp.eq.s32.totalorder %s13, 0
      %p66 = por %p64, %p65
      %p67 = scmp.ne.s32.totalorder %s59, %s61
      %p68 = scmp.eq.s32.totalorder %s18, 2
      %p69 = por %p67, %p68
      %p70 = scmp.ne.s32.totalorder %s61, %s62
      %p71 = scmp.eq.s32.totalorder %s18, 0
      %p72 = por %p70, %p71
      %p73 = scmp.ne.s32.totalorder %s61, %s62
      %p74 = scmp.eq.s32.totalorder %s19, 2
      %p75 = por %p73, %p74
      %p77 = scmp.ne.s32.totalorder %s62, %s76
      %p78 = scmp.eq.s32.totalorder %s19, 0
      %p79 = por %p77, %p78
      %s81 = sadd.s32 %s80, 1
      %p84 = scmp.eq.s32.totalorder %s13, 2
      %p85 = scmp.ne.s32.totalorder %s80, %s82
      %p86 = scmp.eq.s32.totalorder %s13, 0
      %p87 = por %p85, %p86
      %p88 = scmp.ne.s32.totalorder %s80, %s82
      %p89 = scmp.eq.s32.totalorder %s18, 2
      %p90 = por %p88, %p89
      %p91 = scmp.ne.s32.totalorder %s82, %s83
      %p92 = scmp.eq.s32.totalorder %s18, 0
      %p93 = por %p91, %p92
      %p94 = scmp.ne.s32.totalorder %s82, %s83
      %p95 = scmp.eq.s32.totalorder %s19, 2
      %p96 = por %p94, %p95
      %p98 = scmp.ne.s32.totalorder %s83, %s97
      %p99 = scmp.eq.s32.totalorder %s19, 0
      %p100 = por %p98, %p99
      %s102 = sadd.s32 %s101, 1
      %p105 = scmp.eq.s32.totalorder %s13, 2
      %p106 = scmp.ne.s32.totalorder %s101, %s103
      %p107 = scmp.eq.s32.totalorder %s13, 0
      %p108 = por %p106, %p107
      %p109 = scmp.ne.s32.totalorder %s101, %s103
      %p110 = scmp.eq.s32.totalorder %s18, 2
      %p111 = por %p109, %p110
      %p112 = scmp.ne.s32.totalorder %s103, %s104
      %p113 = scmp.eq.s32.totalorder %s18, 0
      %p114 = por %p112, %p113
      %p115 = scmp.ne.s32.totalorder %s103, %s104
      %p116 = scmp.eq.s32.totalorder %s19, 2
      %p117 = por %p115, %p116
      %p119 = scmp.ne.s32.totalorder %s104, %s118
      %p120 = scmp.eq.s32.totalorder %s19, 0
      %p121 = por %p119, %p120
      %s123 = sadd.s32 %s122, 1
      %p126 = scmp.eq.s32.totalorder %s13, 2
      %p127 = scmp.ne.s32.totalorder %s122, %s124
      %p128 = scmp.eq.s32.totalorder %s13, 0
      %p129 = por %p127, %p128
      %p130 = scmp.ne.s32.totalorder %s122, %s124
      %p131 = scmp.eq.s32.totalorder %s18, 2
      %p132 = por %p130, %p131
      %p133 = scmp.ne.s32.totalorder %s124, %s125
      %p134 = scmp.eq.s32.totalorder %s18, 0
      %p135 = por %p133, %p134
      %p136 = scmp.ne.s32.totalorder %s124, %s125
      %p137 = scmp.eq.s32.totalorder %s19, 2
      %p138 = por %p136, %p137
      %p140 = scmp.ne.s32.totalorder %s125, %s139
      %p141 = scmp.eq.s32.totalorder %s19, 0
      %p142 = por %p140, %p141
      %s144 = sadd.s32 %s143, 1
      %p147 = scmp.eq.s32.totalorder %s13, 2
      %p148 = scmp.ne.s32.totalorder %s143, %s145
      %p149 = scmp.eq.s32.totalorder %s13, 0
      %p150 = por %p148, %p149
      %p151 = scmp.ne.s32.totalorder %s143, %s145
      %p152 = scmp.eq.s32.totalorder %s18, 2
      %p153 = por %p151, %p152
      %p154 = scmp.ne.s32.totalorder %s145, %s146
      %p155 = scmp.eq.s32.totalorder %s18, 0
      %p156 = por %p154, %p155
      %p157 = scmp.ne.s32.totalorder %s145, %s146
      %p158 = scmp.eq.s32.totalorder %s19, 2
      %p159 = por %p157, %p158
      %p161 = scmp.ne.s32.totalorder %s146, %s160
      %p162 = scmp.eq.s32.totalorder %s19, 0
      %p163 = por %p161, %p162
      %s164 = ssub.s32 %s21, %s28
      %p165 = scmp.eq.s32.totalorder %s164, 0
      %s167 = sadd.s32 %s166, 1
      %s168 = scalar_select %p165, %s166, %s167
      %p171 = pneg %p165
      %p172 = scmp.eq.s32.totalorder %s13, 2
      %p173 = por %p171, %p172
      %p174 = scmp.ne.s32.totalorder %s166, %s169
      %p175 = scmp.eq.s32.totalorder %s13, 0
      %p176 = por %p174, %p175
      %p177 = scmp.ne.s32.totalorder %s166, %s169
      %p178 = scmp.eq.s32.totalorder %s18, 2
      %p179 = por %p177, %p178
      %p180 = scmp.ne.s32.totalorder %s169, %s170
      %p181 = scmp.eq.s32.totalorder %s18, 0
      %p182 = por %p180, %p181
      %p183 = scmp.ne.s32.totalorder %s169, %s170
      %p184 = scmp.eq.s32.totalorder %s19, 2
      %p185 = por %p183, %p184
      %p187 = scmp.ne.s32.totalorder %s170, %s186
      %p188 = scmp.eq.s32.totalorder %s19, 0
      %p189 = por %p187, %p188
      %p190 = scmp.le.s32.totalorder 1, %s13
      %p191 = scmp.lt.s32.totalorder %s13, 4
      %p192 = pnand %p190, %p191
      %p193 = pneg %p192
      // Predicated region
      $region9: #{tpu_custom_call.1} parent=5 // pred_check
        _
      $region10: #{tpu_custom_call.1} parent=5 // pred_check_branch
        %195 = sbr.rel (%p192) target = $region12
      $region11: #{tpu_custom_call.1} parent=5 // pred_region
        %s196 = ssub.s32 %s13, 1
        // Predicated region
        $region13: #{tpu_custom_call.1} parent=11 // pred_check
          %p197 = pneg %p51
        $region14: #{tpu_custom_call.1} parent=11 // pred_check_branch
          %199 = sbr.rel (%p197) target = $region16
        $region15: #{tpu_custom_call.1} parent=11 // pred_region
          %p200 = scmp.lt.s32.totalorder %s23, 0
          %s201 = scalar_select %p200, %s23, 0
          %s202 = smul.addr %s201, 4
          %s203 = scalar_lea.vmem %s0, %s202
        $region16: #{tpu_custom_call.1} parent=11 // pred_fallthru
          _
        // Predicated region
        $region17: #{tpu_custom_call.1} parent=11 // pred_check
          %p204 = pneg %p72
        $region18: #{tpu_custom_call.1} parent=11 // pred_check_branch
          %206 = sbr.rel (%p204) target = $region20
        $region19: #{tpu_custom_call.1} parent=11 // pred_region
          _
        $region20: #{tpu_custom_call.1} parent=11 // pred_fallthru
          _
        // Predicated region
        $region21: #{tpu_custom_call.1} parent=11 // pred_check
          %p207 = pneg %p93
        $region22: #{tpu_custom_call.1} parent=11 // pred_check_branch
          %209 = sbr.rel (%p207) target = $region24
        $region23: #{tpu_custom_call.1} parent=11 // pred_region
          _
        $region24: #{tpu_custom_call.1} parent=11 // pred_fallthru
          _
        // Predicated region
        $region25: #{tpu_custom_call.1} parent=11 // pred_check
          %p210 = pneg %p114
        $region26: #{tpu_custom_call.1} parent=11 // pred_check_branch
          %212 = sbr.rel (%p210) target = $region28
        $region27: #{tpu_custom_call.1} parent=11 // pred_region
          _
        $region28: #{tpu_custom_call.1} parent=11 // pred_fallthru
          _
        // Predicated region
        $region29: #{tpu_custom_call.1} parent=11 // pred_check
          %p213 = pneg %p135
        $region30: #{tpu_custom_call.1} parent=11 // pred_check_branch
          %215 = sbr.rel (%p213) target = $region32
        $region31: #{tpu_custom_call.1} parent=11 // pred_region
          _
        $region32: #{tpu_custom_call.1} parent=11 // pred_fallthru
          _
        // Predicated region
        $region33: #{tpu_custom_call.1} parent=11 // pred_check
          %p216 = pneg %p156
        $region34: #{tpu_custom_call.1} parent=11 // pred_check_branch
          %218 = sbr.rel (%p216) target = $region36
        $region35: #{tpu_custom_call.1} parent=11 // pred_region
          _
        $region36: #{tpu_custom_call.1} parent=11 // pred_fallthru
          _
      $region12: #{tpu_custom_call.1} parent=5 // pred_fallthru
        _
      %p219 = scmp.lt.s32.totalorder %s13, 3
      // Predicated region
      $region37: #{tpu_custom_call.1} parent=5 // pred_check
        %p220 = pneg %p219
      $region38: #{tpu_custom_call.1} parent=5 // pred_check_branch
        %222 = sbr.rel (%p220) target = $region40
      $region39: #{tpu_custom_call.1} parent=5 // pred_region
        _
      $region40: #{tpu_custom_call.1} parent=5 // pred_fallthru
        _
      %p223 = scmp.le.s32.totalorder 1, %s13
      %p224 = scmp.lt.s32.totalorder %s13, 4
      %p225 = pnand %p223, %p224
      %p226 = pneg %p225
      // Predicated region
      $region41: #{tpu_custom_call.1} parent=5 // pred_check
        _
      $region42: #{tpu_custom_call.1} parent=5 // pred_check_branch
        %228 = sbr.rel (%p225) target = $region44
      $region43: #{tpu_custom_call.1} parent=5 // pred_region
        %s229 = ssub.s32 %s13, 1
        %p230 = scmp.lt.s32.totalorder %s23, 0
        %s231 = scalar_select %p230, %s23, 0
        %s232 = smul.addr %s231, 4
        %s233 = scalar_lea.vmem %s0, %s232
        %p234 = pneg %p51
        %p235 = pneg %p48
        %p236 = pneg %p72
        %p237 = pneg %p69
        %p238 = pneg %p93
        %p239 = pneg %p90
        %p240 = pneg %p114
        %p241 = pneg %p111
        %p242 = pneg %p135
        %p243 = pneg %p132
        %p244 = pneg %p156
        %p245 = pneg %p153
        %p246 = pneg %p182
        %p247 = pneg %p179
        %p248 = scmp.lt.s32.totalorder %s23, 0
        %s249 = scalar_select %p248, %s23, 0
        %s250 = smul.addr %s249, 4
        %s251 = scalar_lea.vmem %s0, %s250
        %v253 = vlaneseq
        %v254 = vand.u32 %v253, 127
        %s255 = smul.u32 %s23, 128
        %v256 = vstv %s255
        %v257 = vadd.s32 %v256, %v254
        %vm258 = vcmp.lt.s32.totalorder %v257, 128
        %p259 = scmp.eq.s32.totalorder %s22, 0
        %p260 = scmp.eq.s32.totalorder %s23, 0
        %p261 = pnand %p259, %p260
        %p262 = pneg %p261
        // Predicated region
        $region45: #{tpu_custom_call.1} parent=43 // pred_check
          _
        $region46: #{tpu_custom_call.1} parent=43 // pred_check_branch
          %264 = sbr.rel (%p261) target = $region48
        $region47: #{tpu_custom_call.1} parent=43 // pred_region
          %vm265 = vcmask 7168
          %266 = vst.msk [vmem:[#allocation2] sm:$0xff] %vm265, 0.0
          %267 = vst.msk [vmem:[#allocation2 + $0x8] sm:$0xff] %vm265, 0.0
          %268 = vst.msk [vmem:[#allocation2 + $0x10] sm:$0xff] %vm265, 0.0
          %269 = vst.msk [vmem:[#allocation2 + $0x18] sm:$0xff] %vm265, 0.0
          %270 = vst.msk [vmem:[#allocation2 + $0x20] sm:$0xff] %vm265, 0.0
          %271 = vst.msk [vmem:[#allocation2 + $0x28] sm:$0xff] %vm265, 0.0
        $region48: #{tpu_custom_call.1} parent=43 // pred_fallthru
          _
        // Predicated region
        $region49: #{tpu_custom_call.1} parent=43 // pred_check
          %p272 = pneg %p259
        $region50: #{tpu_custom_call.1} parent=43 // pred_check_branch
          %274 = sbr.rel (%p272) target = $region52
        $region51: #{tpu_custom_call.1} parent=43 // pred_region
          %v275 = vld [vmem:[%s251] sm:$0xf]
          %v276 = vld [vmem:[%s1] sm:$0xff]
          %v277 = vpack.c.bf16 %v276, %v276
          %v278 = vpack.c.bf16 %v275, %v275
          %vm279 = vcmask 31744
          %v281 = vsel %vm279, %v277, 0
          %vm283 = vcmask 1041408
          %v285 = vsel %vm283, %v278, 0
          %287 = vmatpush.bf16.msra.mxu0 0
          %288 = vmatpush.bf16.msra.mxu0 0
          %289 = vmatpush.bf16.msra.mxu0 0
          %290 = vmatpush.bf16.msra.mxu0 0
          %291 = vmatpush.bf16.msra.mxu0 0
          %292 = vmatpush.bf16.msra.mxu0 0
          %293 = vmatpush.bf16.msra.mxu0 0
          %294 = vmatpush.bf16.msra.mxu0 %v285
          %295 = vmatmul.bf16.gmra.mxu0 %v281
          %v296 = vpop.f32.mrf.mxu0
          %v297 = vadd.f32 0.0, %v296
          %v298 = vpop.f32.mrf.mxu0
          %299 = vdwg.mxu0
          %v300 = vsel %vm258, 1, 0
          %vm301 = vcmp.eq.s32.totalorder %v300, 1
          %v302 = vsel %vm301, %v297, 0.0
          %v303 = vld [vmem:[#allocation2] sm:$0xff]
          %304 = vadd.xlane.f32.xlu0 %v302
          %v305 = vpop.xlane.xlu0 %304
          %v306 = vadd.f32 %v303, %v305
          %vm307 = vcmask 7168
          %308 = vst.msk [vmem:[#allocation2] sm:$0xff] %vm307, %v306
          %s309 = scalar_lea.vmem [#allocation2], 8
          %v310 = vld [vmem:[%s309] sm:$0xff]
          %v311 = vmul.f32 %v302, %v302
          %312 = vadd.xlane.f32.xlu0 %v311
          %v313 = vpop.xlane.xlu0 %312
          %v314 = vadd.f32 %v310, %v313
          %315 = vst.msk [vmem:[%s309] sm:$0xff] %vm307, %v314
          %v316 = vld [vmem:[%s3] sm:$0xff]
          %v317 = vpack.c.bf16 %v316, %v316
          %v319 = vsel %vm279, %v317, 0
          %321 = vmatpush.bf16.msra.mxu0 0
          %322 = vmatpush.bf16.msra.mxu0 0
          %323 = vmatpush.bf16.msra.mxu0 0
          %324 = vmatpush.bf16.msra.mxu0 0
          %325 = vmatpush.bf16.msra.mxu0 0
          %326 = vmatpush.bf16.msra.mxu0 0
          %327 = vmatpush.bf16.msra.mxu0 0
          %328 = vmatpush.bf16.msra.mxu0 %v285
          %329 = vmatmul.bf16.gmra.mxu0 %v319
          %v330 = vpop.f32.mrf.mxu0
          %v331 = vadd.f32 0.0, %v330
          %v332 = vpop.f32.mrf.mxu0
          %333 = vdwg.mxu0
          %v334 = vsel %vm301, %v331, 0.0
          %s335 = scalar_lea.vmem [#allocation2], 32
          %v336 = vld [vmem:[%s335] sm:$0xff]
          %337 = vadd.xlane.f32.xlu0 %v334
          %v338 = vpop.xlane.xlu0 %337
          %v339 = vadd.f32 %v336, %v338
          %340 = vst.msk [vmem:[%s335] sm:$0xff] %vm307, %v339
          %s341 = scalar_lea.vmem [#allocation2], 40
          %v342 = vld [vmem:[%s341] sm:$0xff]
          %v343 = vmul.f32 %v334, %v334
          %344 = vadd.xlane.f32.xlu0 %v343
          %v345 = vpop.xlane.xlu0 %344
          %v346 = vadd.f32 %v342, %v345
          %347 = vst.msk [vmem:[%s341] sm:$0xff] %vm307, %v346
        $region52: #{tpu_custom_call.1} parent=43 // pred_fallthru
          _
        %p348 = scmp.eq.s32.totalorder %s22, 1
        // Predicated region
        $region53: #{tpu_custom_call.1} parent=43 // pred_check
          %p349 = pneg %p348
        $region54: #{tpu_custom_call.1} parent=43 // pred_check_branch
          %351 = sbr.rel (%p349) target = $region56
        $region55: #{tpu_custom_call.1} parent=43 // pred_region
          %v352 = vld [vmem:[%s251] sm:$0xf]
          %v353 = vld [vmem:[%s1] sm:$0xff]
          %v354 = vpack.c.bf16 %v353, %v353
          %v355 = vpack.c.bf16 %v352, %v352
          %vm356 = vcmask 31744
          %v358 = vsel %vm356, %v354, 0
          %vm360 = vcmask 1041408
          %v362 = vsel %vm360, %v355, 0
          %364 = vmatpush.bf16.msra.mxu0 0
          %365 = vmatpush.bf16.msra.mxu0 0
          %366 = vmatpush.bf16.msra.mxu0 0
          %367 = vmatpush.bf16.msra.mxu0 0
          %368 = vmatpush.bf16.msra.mxu0 0
          %369 = vmatpush.bf16.msra.mxu0 0
          %370 = vmatpush.bf16.msra.mxu0 0
          %371 = vmatpush.bf16.msra.mxu0 %v362
          %372 = vmatmul.bf16.gmra.mxu0 %v358
          %v373 = vpop.f32.mrf.mxu0
          %v374 = vadd.f32 0.0, %v373
          %v375 = vpop.f32.mrf.mxu0
          %376 = vdwg.mxu0
          %v377 = vld [vmem:[#allocation2] sm:$0xff]
          %v378 = vmul.f32 %v377, 0.0078125
          %s379 = scalar_lea.vmem [#allocation2], 8
          %v380 = vld [vmem:[%s379] sm:$0xff]
          %v381 = vmul.f32 %v380, 0.0078125
          %v382 = vmul.f32 %v378, %v378
          %v383 = vsub.f32 %v381, %v382
          %v384 = vmax.f32 %v383, 0.0
          %v385 = vadd.f32 %v384, 1e-05
          %v386 = vrsqrt.pop %v385
          %v387 = vmul.f32 %v386, %v385
          %v388 = vmul.f32 %v387, %v386
          %v389 = vmul.f32 0.5, %v388
          %v390 = vsub.f32 1.5, %v389
          %v391 = vmul.f32 %v386, %v390
          %vm392 = vweird.f32 %v385
          %vm393 = vweird.f32 %v386
          %vm394 = vmor %vm392, %vm393
          %v395 = vsel %vm394, %v386, %v391
          %v396 = vld [vmem:[%s4] sm:$0xff]
          %v397 = vmul.f32 %v395, %v396
          %399 = vset.pattern.permute.xlu0 0
          %400 = vperm.xlu0 %399, %v378
          %v401 = vpop.permute.xlu0 %400
          %v403 = vsub.f32 %v374, %v401
          %405 = vset.pattern.permute.xlu0 0
          %406 = vperm.xlu0 %405, %v397
          %v407 = vpop.permute.xlu0 %406
          %v409 = vmul.f32 %v403, %v407
          %v410 = vld [vmem:[%s5] sm:$0xff]
          %412 = vset.pattern.permute.xlu0 0
          %413 = vperm.xlu0 %412, %v410
          %v414 = vpop.permute.xlu0 %413
          %v416 = vadd.f32 %v409, %v414
          %v417 = vmax.f32 %v416, 0.0
          %v418 = vld [vmem:[%s2] sm:$0xff]
          %v419 = vpack.c.bf16 %v418, %v418
          %v420 = vpack.c.bf16 %v417, %v417
          %vm421 = vcmask 64512
          %v423 = vsel %vm421, %v419, 0
          %vm425 = vcmask 1043456
          %v427 = vsel %vm425, %v420, 0
          %429 = vmatpush.bf16.msra.mxu0 0
          %430 = vmatpush.bf16.msra.mxu0 0
          %431 = vmatpush.bf16.msra.mxu0 0
          %432 = vmatpush.bf16.msra.mxu0 0
          %433 = vmatpush.bf16.msra.mxu0 0
          %434 = vmatpush.bf16.msra.mxu0 0
          %435 = vmatpush.bf16.msra.mxu0 0
          %436 = vmatpush.bf16.msra.mxu0 %v427
          %437 = vmatmul.bf16.gmra.mxu0 %v423
          %v438 = vpop.f32.mrf.mxu0
          %v439 = vadd.f32 0.0, %v438
          %v440 = vpop.f32.mrf.mxu0
          %441 = vdwg.mxu0
          %v442 = vsel %vm258, 1, 0
          %vm443 = vcmp.eq.s32.totalorder %v442, 1
          %v444 = vsel %vm443, %v439, 0.0
          %s445 = scalar_lea.vmem [#allocation2], 16
          %v446 = vld [vmem:[%s445] sm:$0xff]
          %447 = vadd.xlane.f32.xlu0 %v444
          %v448 = vpop.xlane.xlu0 %447
          %v449 = vadd.f32 %v446, %v448
          %vm450 = vcmask 7168
          %451 = vst.msk [vmem:[%s445] sm:$0xff] %vm450, %v449
          %s452 = scalar_lea.vmem [#allocation2], 24
          %v453 = vld [vmem:[%s452] sm:$0xff]
          %v454 = vmul.f32 %v444, %v444
          %455 = vadd.xlane.f32.xlu0 %v454
          %v456 = vpop.xlane.xlu0 %455
          %v457 = vadd.f32 %v453, %v456
          %458 = vst.msk [vmem:[%s452] sm:$0xff] %vm450, %v457
        $region56: #{tpu_custom_call.1} parent=43 // pred_fallthru
          _
        %p459 = scmp.eq.s32.totalorder %s22, 2
        // Predicated region
        $region57: #{tpu_custom_call.1} parent=43 // pred_check
          %p460 = pneg %p459
        $region58: #{tpu_custom_call.1} parent=43 // pred_check_branch
          %462 = sbr.rel (%p460) target = $region60
        $region59: #{tpu_custom_call.1} parent=43 // pred_region
          %v463 = vld [vmem:[%s251] sm:$0xf]
          %v464 = vld [vmem:[%s1] sm:$0xff]
          %v465 = vpack.c.bf16 %v464, %v464
          %v466 = vpack.c.bf16 %v463, %v463
          %vm467 = vcmask 31744
          %v469 = vsel %vm467, %v465, 0
          %vm471 = vcmask 1041408
          %v473 = vsel %vm471, %v466, 0
          %475 = vmatpush.bf16.msra.mxu0 0
          %476 = vmatpush.bf16.msra.mxu0 0
          %477 = vmatpush.bf16.msra.mxu0 0
          %478 = vmatpush.bf16.msra.mxu0 0
          %479 = vmatpush.bf16.msra.mxu0 0
          %480 = vmatpush.bf16.msra.mxu0 0
          %481 = vmatpush.bf16.msra.mxu0 0
          %482 = vmatpush.bf16.msra.mxu0 %v473
          %483 = vmatmul.bf16.gmra.mxu0 %v469
          %v484 = vpop.f32.mrf.mxu0
          %v485 = vadd.f32 0.0, %v484
          %v486 = vpop.f32.mrf.mxu0
          %487 = vdwg.mxu0
          %v488 = vld [vmem:[#allocation2] sm:$0xff]
          %v489 = vmul.f32 %v488, 0.0078125
          %s490 = scalar_lea.vmem [#allocation2], 8
          %v491 = vld [vmem:[%s490] sm:$0xff]
          %v492 = vmul.f32 %v491, 0.0078125
          %v493 = vmul.f32 %v489, %v489
          %v494 = vsub.f32 %v492, %v493
          %v495 = vmax.f32 %v494, 0.0
          %v496 = vadd.f32 %v495, 1e-05
          %v497 = vrsqrt.pop %v496
          %v498 = vmul.f32 %v497, %v496
          %v499 = vmul.f32 %v498, %v497
          %v500 = vmul.f32 0.5, %v499
          %v501 = vsub.f32 1.5, %v500
          %v502 = vmul.f32 %v497, %v501
          %vm503 = vweird.f32 %v496
          %vm504 = vweird.f32 %v497
          %vm505 = vmor %vm503, %vm504
          %v506 = vsel %vm505, %v497, %v502
          %v507 = vld [vmem:[%s4] sm:$0xff]
          %v508 = vmul.f32 %v506, %v507
          %510 = vset.pattern.permute.xlu0 0
          %511 = vperm.xlu0 %510, %v489
          %v512 = vpop.permute.xlu0 %511
          %v514 = vsub.f32 %v485, %v512
          %516 = vset.pattern.permute.xlu0 0
          %517 = vperm.xlu0 %516, %v508
          %v518 = vpop.permute.xlu0 %517
          %v520 = vmul.f32 %v514, %v518
          %v521 = vld [vmem:[%s5] sm:$0xff]
          %523 = vset.pattern.permute.xlu0 0
          %524 = vperm.xlu0 %523, %v521
          %v525 = vpop.permute.xlu0 %524
          %v527 = vadd.f32 %v520, %v525
          %v528 = vmax.f32 %v527, 0.0
          %v529 = vld [vmem:[%s2] sm:$0xff]
          %v530 = vpack.c.bf16 %v529, %v529
          %v531 = vpack.c.bf16 %v528, %v528
          %vm532 = vcmask 64512
          %v534 = vsel %vm532, %v530, 0
          %vm536 = vcmask 1043456
          %v538 = vsel %vm536, %v531, 0
          %540 = vmatpush.bf16.msra.mxu0 0
          %541 = vmatpush.bf16.msra.mxu0 0
          %542 = vmatpush.bf16.msra.mxu0 0
          %543 = vmatpush.bf16.msra.mxu0 0
          %544 = vmatpush.bf16.msra.mxu0 0
          %545 = vmatpush.bf16.msra.mxu0 0
          %546 = vmatpush.bf16.msra.mxu0 0
          %547 = vmatpush.bf16.msra.mxu0 %v538
          %548 = vmatmul.bf16.gmra.mxu0 %v534
          %v549 = vpop.f32.mrf.mxu0
          %v550 = vadd.f32 0.0, %v549
          %v551 = vpop.f32.mrf.mxu0
          %552 = vdwg.mxu0
          %s553 = scalar_lea.vmem [#allocation2], 16
          %v554 = vld [vmem:[%s553] sm:$0xff]
          %v555 = vmul.f32 %v554, 0.0078125
          %s556 = scalar_lea.vmem [#allocation2], 24
          %v557 = vld [vmem:[%s556] sm:$0xff]
          %v558 = vmul.f32 %v557, 0.0078125
          %v559 = vmul.f32 %v555, %v555
          %v560 = vsub.f32 %v558, %v559
          %v561 = vmax.f32 %v560, 0.0
          %v562 = vadd.f32 %v561, 1e-05
          %v563 = vrsqrt.pop %v562
          %v564 = vmul.f32 %v563, %v562
          %v565 = vmul.f32 %v564, %v563
          %v566 = vmul.f32 0.5, %v565
          %v567 = vsub.f32 1.5, %v566
          %v568 = vmul.f32 %v563, %v567
          %vm569 = vweird.f32 %v562
          %vm570 = vweird.f32 %v563
          %vm571 = vmor %vm569, %vm570
          %v572 = vsel %vm571, %v563, %v568
          %574 = vrot.lane.b32.xlu0 %v507, 127
          %v575 = vpop.permute.xlu0 %574
          %v577 = vmul.f32 %v572, %v575
          %579 = vset.pattern.permute.xlu0 0
          %580 = vperm.xlu0 %579, %v555
          %v581 = vpop.permute.xlu0 %580
          %v583 = vsub.f32 %v550, %v581
          %585 = vset.pattern.permute.xlu0 0
          %586 = vperm.xlu0 %585, %v577
          %v587 = vpop.permute.xlu0 %586
          %v589 = vmul.f32 %v583, %v587
          %590 = vset.pattern.permute.xlu0 1
          %591 = vperm.xlu0 %590, %v521
          %v592 = vpop.permute.xlu0 %591
          %v594 = vadd.f32 %v589, %v592
          %v595 = vld [vmem:[%s3] sm:$0xff]
          %v596 = vpack.c.bf16 %v595, %v595
          %v598 = vsel %vm467, %v596, 0
          %600 = vmatpush.bf16.msra.mxu0 0
          %601 = vmatpush.bf16.msra.mxu0 0
          %602 = vmatpush.bf16.msra.mxu0 0
          %603 = vmatpush.bf16.msra.mxu0 0
          %604 = vmatpush.bf16.msra.mxu0 0
          %605 = vmatpush.bf16.msra.mxu0 0
          %606 = vmatpush.bf16.msra.mxu0 0
          %607 = vmatpush.bf16.msra.mxu0 %v473
          %608 = vmatmul.bf16.gmra.mxu0 %v598
          %v609 = vpop.f32.mrf.mxu0
          %v610 = vadd.f32 0.0, %v609
          %v611 = vpop.f32.mrf.mxu0
          %612 = vdwg.mxu0
          %s613 = scalar_lea.vmem [#allocation2], 32
          %v614 = vld [vmem:[%s613] sm:$0xff]
          %v615 = vmul.f32 %v614, 0.0078125
          %s616 = scalar_lea.vmem [#allocation2], 40
          %v617 = vld [vmem:[%s616] sm:$0xff]
          %v618 = vmul.f32 %v617, 0.0078125
          %v619 = vmul.f32 %v615, %v615
          %v620 = vsub.f32 %v618, %v619
          %v621 = vmax.f32 %v620, 0.0
          %v622 = vadd.f32 %v621, 1e-05
          %v623 = vrsqrt.pop %v622
          %v624 = vmul.f32 %v623, %v622
          %v625 = vmul.f32 %v624, %v623
          %v626 = vmul.f32 0.5, %v625
          %v627 = vsub.f32 1.5, %v626
          %v628 = vmul.f32 %v623, %v627
          %vm629 = vweird.f32 %v622
          %vm630 = vweird.f32 %v623
          %vm631 = vmor %vm629, %vm630
          %v632 = vsel %vm631, %v623, %v628
          %633 = vrot.lane.b32.xlu0 %v507, 126
          %v634 = vpop.permute.xlu0 %633
          %v636 = vmul.f32 %v632, %v634
          %638 = vset.pattern.permute.xlu0 0
          %639 = vperm.xlu0 %638, %v615
          %v640 = vpop.permute.xlu0 %639
          %v642 = vsub.f32 %v610, %v640
          %644 = vset.pattern.permute.xlu0 0
          %645 = vperm.xlu0 %644, %v636
          %v646 = vpop.permute.xlu0 %645
          %v648 = vmul.f32 %v642, %v646
          %649 = vset.pattern.permute.xlu0 2
          %650 = vperm.xlu0 %649, %v521
          %v651 = vpop.permute.xlu0 %650
          %v653 = vadd.f32 %v648, %v651
          %v654 = vadd.f32 %v594, %v653
          %v655 = vmax.f32 %v654, 0.0
          %656 = vst [vmem:[#allocation3] sm:$0xff] %v655
        $region60: #{tpu_custom_call.1} parent=43 // pred_fallthru
          _
        // Predicated region
        $region61: #{tpu_custom_call.1} parent=43 // pred_check
          %p657 = pneg %p179
        $region62: #{tpu_custom_call.1} parent=43 // pred_check_branch
          %659 = sbr.rel (%p657) target = $region64
        $region63: #{tpu_custom_call.1} parent=43 // pred_region
          %661 = vsyncadd [#allocation4], 0
          %s662 = smul.addr %s23, 8
          %s663 = scalar_lea.hbm %s6, %s662
          %s665 = sshll.u32 [#allocation3], 4
          %s666 = int_to_ptr.vmem [resolvable:$true] %s665
          %s667 = sshll.u32 %s663, 4
          %s668 = int_to_ptr.hbm [resolvable:$true] %s667
          %670 = dma.vmem_to_hbm [thread:$0]  %s666, 128, %s668, [#allocation4]
        $region64: #{tpu_custom_call.1} parent=43 // pred_fallthru
          _
        // Predicated region
        $region65: #{tpu_custom_call.1} parent=43 // pred_check
          %p671 = pneg %p179
        $region66: #{tpu_custom_call.1} parent=43 // pred_check_branch
          %673 = sbr.rel (%p671) target = $region68
        $region67: #{tpu_custom_call.1} parent=43 // pred_region
          %675 = dma.done [#allocation4], 128
        $region68: #{tpu_custom_call.1} parent=43 // pred_fallthru
          _
      $region44: #{tpu_custom_call.1} parent=5 // pred_fallthru
        _
      %p676 = scmp.le.s32.totalorder 2, %s13
      // Predicated region
      $region69: #{tpu_custom_call.1} parent=5 // pred_check
        %p677 = pneg %p676
      $region70: #{tpu_custom_call.1} parent=5 // pred_check_branch
        %679 = sbr.rel (%p677) target = $region72
      $region71: #{tpu_custom_call.1} parent=5 // pred_region
        %s680 = ssub.s32 %s13, 2
      $region72: #{tpu_custom_call.1} parent=5 // pred_fallthru
        _
    $region6: #{tpu_custom_call.1} parent=1 // loop_footer
      %s17 = sadd.s32 1, %s13
    $region7: #{tpu_custom_call.1} parent=1 // loop_footer_branch
      %12 = sbr.rel target = $region3
    $region8: #{tpu_custom_call.1} parent=1 // loop_exit
      _
    %681 = vsyncpa [#allocation4], 1
    %s682 = scalar_lea.sflag [#allocation4], 1
    %683 = vsyncpa %s682, 1

</llo_original>
